<compile_context>
chip_gen: v7x
topology: tpu7x:2x2x1
jax: 0.10.0
libtpu: 0.0.40
codegen_flags: <defaults>
</compile_context>

<pallas_src>
from functools import partial

import jax
import jax.numpy as jnp
import numpy as np
from jax.experimental import pallas as pl
from jax.experimental.pallas import tpu as pltpu


def mimn_kernel(patches_ref, w_ref, b_ref, gamma_ref, beta_ref,
                c_ref, ctw_ref, ocw_ref, hnew_ref, cnew_ref):
    # patches: (2*K*K*C, N) bf16   w: (8C, 2*K*K*C) bf16 (block-diagonal)
    # b/gamma/beta: (8C, 1) f32    c/ocw: (C, N) f32     ctw: (2C, N) f32
    C, N = c_ref.shape
    eps = 1e-5

    # Single MXU pass drives both conv branches -> (8C, N) f32.
    z = jnp.dot(w_ref[...], patches_ref[...],
                preferred_element_type=jnp.float32) + b_ref[...]

    # Training-mode BatchNorm for both branches, one fused stats pass:
    # per-row (= per-channel) mean and mean-of-squares via one cross-lane
    # reduction over the stacked [z ; z*z] slab.
    zz = jnp.concatenate([z, z * z], axis=0)               # (16C, N)
    s = jnp.sum(zz, axis=-1, keepdims=True) * (1.0 / N)    # (16C, 1)
    mean = s[:8 * C]
    var = s[8 * C:] - mean * mean
    zn = (z - mean) * jax.lax.rsqrt(var + eps) * gamma_ref[...] + beta_ref[...]

    # Gate slices are sublane-aligned row windows (C is a multiple of 8).
    i_h, g_h, f_h, o_h = (zn[k * C:(k + 1) * C] for k in range(4))
    i_x, g_x, f_x, o_x = (zn[(4 + k) * C:(5 + k) * C] for k in range(4))

    c_t = c_ref[...]
    ctw = ctw_ref[...]
    i_c = c_t * ctw[:C]       # c_t.repeat([1,2,1,1]) * ct_weight, first half
    f_c = c_t * ctw[C:]       # second half

    def sigmoid(v):
        # exp + approximate reciprocal both live on the EUP slot (VALU stays free)
        return pl.reciprocal(1.0 + jnp.exp(-v), approx=True)

    i_ = sigmoid(i_h + i_c + i_x)
    f_ = sigmoid(f_h + f_c + f_x + 1.0)        # _forget_bias = 1.0
    g_ = jnp.tanh(g_h + g_x)
    c_new = f_ * c_t + i_ * g_
    o_ = o_h + o_x + c_new * ocw_ref[...]
    h_new = sigmoid(o_) * jnp.tanh(c_new)

    hnew_ref[...] = h_new                      # (C, N): lane-dense, unmasked
    cnew_ref[...] = c_new                      # aliased onto c_t's HBM buffer


def _im2col_t(a, K, pad):
    """(B, H, W, C) NHWC -> transposed im2col patches (K*K*C, B*H*W).

    Row ordering is tap-major / channel-minor to match the HWIO weight
    reshape (K, K, C, 4C) -> (K*K*C, 4C).
    """
    B, H, W, C = a.shape
    ap = jnp.pad(a, ((0, 0), (pad, pad), (pad, pad), (0, 0)))
    taps = [ap[:, dy:dy + H, dx:dx + W, :] for dy in range(K) for dx in range(K)]
    patches = jnp.stack(taps, axis=3)                   # (B, H, W, K*K, C)
    return patches.reshape(B * H * W, K * K * C).T      # (K*K*C, N)


@partial(jax.jit, static_argnames=("filter_size",))
def mimn_forward(x, h_t, c_t, ct_weight, oc_weight, params, *, filter_size=5):
    """x, h_t, c_t, oc_weight: (B,H,W,C) NHWC; ct_weight: (B,H,W,2C)."""
    B, H, W, C = h_t.shape
    K = filter_size
    pad = (K - 1) // 2
    N = B * H * W
    KKC = K * K * C

    # TODO(synk): at production shapes the im2col (25x activation inflation)
    # should be built in VMEM scratch inside the kernel (shifted matmuls) and
    # the N axis tiled with a parallel grid + two-pass global BN stats
    # (mandatory on v7x: 64 MiB VMEM, 2 TCs). At this demo size the whole
    # problem is VMEM resident, so the patches stay wrapper-side but are cast
    # to bf16 to halve their HBM traffic.
    patches = jnp.concatenate(
        [_im2col_t(h_t, K, pad), _im2col_t(x, K, pad)], axis=0
    ).astype(jnp.bfloat16)                                   # (2*KKC, N)

    # Block-diagonal fused weight: one bf16 MXU matmul for both conv branches.
    whT = params["wh"].reshape(KKC, 4 * C).T                 # (4C, KKC)
    wxT = params["wx"].reshape(KKC, 4 * C).T
    zeros = jnp.zeros_like(whT)
    w_big = jnp.concatenate(
        [jnp.concatenate([whT, zeros], axis=1),
         jnp.concatenate([zeros, wxT], axis=1)], axis=0
    ).astype(jnp.bfloat16)                                   # (8C, 2*KKC)

    b_big = jnp.concatenate([params["bh"], params["bx"]]).reshape(8 * C, 1)
    gamma = jnp.concatenate([params["gamma_h"], params["gamma_x"]]).reshape(8 * C, 1)
    beta = jnp.concatenate([params["beta_h"], params["beta_x"]]).reshape(8 * C, 1)

    # Transposed state / weights: channels on sublanes, N on lanes.
    c2d = c_t.reshape(N, C).T                                # (C, N)
    ctw2d = ct_weight.reshape(N, 2 * C).T                    # (2C, N)
    ocw2d = oc_weight.reshape(N, C).T                        # (C, N)

    vmem = pl.BlockSpec(memory_space=pltpu.MemorySpace.VMEM)
    h2d, c2d_new = pl.pallas_call(
        mimn_kernel,
        out_shape=(jax.ShapeDtypeStruct((C, N), jnp.float32),
                   jax.ShapeDtypeStruct((C, N), jnp.float32)),
        in_specs=[vmem] * 8,
        out_specs=(vmem, vmem),
        input_output_aliases={5: 1},   # reuse c_t's (C, N) buffer for c_new
    )(patches, w_big, b_big, gamma, beta, c2d, ctw2d, ocw2d)

    return h2d.T.reshape(B, H, W, C), c2d_new.T.reshape(B, H, W, C)


def mimn_reference(x, h_t, c_t, ct_weight, oc_weight, params):
    """Pure-JAX f32 reference mirroring the PyTorch forward (training-mode BN)."""
    C = c_t.shape[-1]
    eps = 1e-5

    def conv(a, w, b):
        out = jax.lax.conv_general_dilated(
            a, w, window_strides=(1, 1), padding=[(2, 2), (2, 2)],
            dimension_numbers=('NHWC', 'HWIO', 'NHWC'))
        return out + b

    def bn(z, gamma, beta):
        mean = jnp.mean(z, axis=(0, 1, 2), keepdims=True)
        var = jnp.mean(jnp.square(z - mean), axis=(0, 1, 2), keepdims=True)
        return (z - mean) / jnp.sqrt(var + eps) * gamma + beta

    hc = bn(conv(h_t, params["wh"], params["bh"]),
            params["gamma_h"], params["beta_h"])
    xc = bn(conv(x, params["wx"], params["bx"]),
            params["gamma_x"], params["beta_x"])

    i_h, g_h, f_h, o_h = [hc[..., i * C:(i + 1) * C] for i in range(4)]
    i_x, g_x, f_x, o_x = [xc[..., i * C:(i + 1) * C] for i in range(4)]
    i_c = c_t * ct_weight[..., :C]
    f_c = c_t * ct_weight[..., C:]

    i_ = jax.nn.sigmoid(i_h + i_c + i_x)
    f_ = jax.nn.sigmoid(f_h + f_c + f_x + 1.0)
    g_ = jnp.tanh(g_h + g_x)
    c_new = f_ * c_t + i_ * g_
    h_new = jax.nn.sigmoid(o_h + o_x + c_new * oc_weight) * jnp.tanh(c_new)
    return h_new, c_new


if __name__ == "__main__":
    # num_hidden=8, filter_size=5 (padding=2 -> "same"), batch=2, 8x8 spatial
    # => N = B*H*W = 128 (exactly one lane width).
    B, C, H, W = 2, 8, 8, 8
    K = 5

    key = jax.random.PRNGKey(0)
    ks = jax.random.split(key, 9)
    x = jax.random.normal(ks[0], (B, H, W, C), jnp.float32)
    h_t = jax.random.normal(ks[1], (B, H, W, C), jnp.float32)
    c_t = jax.random.normal(ks[2], (B, H, W, C), jnp.float32)
    ct_weight = jax.random.normal(ks[3], (B, H, W, 2 * C), jnp.float32)
    oc_weight = jax.random.normal(ks[4], (B, H, W, C), jnp.float32)

    params = {
        # conv weights in HWIO layout, deterministic synthetic init
        "wh": 0.1 * jax.random.normal(ks[5], (K, K, C, 4 * C), jnp.float32),
        "bh": 0.1 * jax.random.normal(ks[6], (4 * C,), jnp.float32),
        "wx": 0.1 * jax.random.normal(ks[7], (K, K, C, 4 * C), jnp.float32),
        "bx": 0.1 * jax.random.normal(ks[8], (4 * C,), jnp.float32),
        # BatchNorm2d affine defaults (weight=1, bias=0)
        "gamma_h": jnp.ones((4 * C,), jnp.float32),
        "beta_h": jnp.zeros((4 * C,), jnp.float32),
        "gamma_x": jnp.ones((4 * C,), jnp.float32),
        "beta_x": jnp.zeros((4 * C,), jnp.float32),
    }

    h_new, c_new = mimn_forward(x, h_t, c_t, ct_weight, oc_weight, params,
                                filter_size=K)
    jax.block_until_ready((h_new, c_new))

    h_ref, c_ref = mimn_reference(x, h_t, c_t, ct_weight, oc_weight, params)
    # Tolerance sized for bf16 MXU inputs (f32 accumulation, f32 gate/BN math).
    np.testing.assert_allclose(np.asarray(h_new), np.asarray(h_ref),
                               atol=2e-2, rtol=2e-2)
    np.testing.assert_allclose(np.asarray(c_new), np.asarray(c_ref),
                               atol=2e-2, rtol=2e-2)
    print("KERNEL_OK")
</pallas_src>

<mosaic_0001>
module attributes {stable_mosaic.version = 11 : i64} {
  func.func @mimn_kernel(%arg0: memref<400x128xbf16, #tpu.memory_space<vmem>>, %arg1: memref<64x400xbf16, #tpu.memory_space<vmem>>, %arg2: memref<64x1xf32, #tpu.memory_space<vmem>>, %arg3: memref<64x1xf32, #tpu.memory_space<vmem>>, %arg4: memref<64x1xf32, #tpu.memory_space<vmem>>, %arg5: memref<8x128xf32, #tpu.memory_space<vmem>>, %arg6: memref<16x128xf32, #tpu.memory_space<vmem>>, %arg7: memref<8x128xf32, #tpu.memory_space<vmem>>, %arg8: memref<8x128xf32, #tpu.memory_space<vmem>>, %arg9: memref<8x128xf32, #tpu.memory_space<vmem>>) attributes {dimension_semantics = [], scalar_prefetch = 0 : i64, scratch_operands = 0 : i64, tpu.core_type = #tpu.core_type<tc>} {
    %c0 = arith.constant 0 : index
    %c0_0 = arith.constant 0 : index
    %0 = vector.load %arg1[%c0, %c0_0] : memref<64x400xbf16, #tpu.memory_space<vmem>>, vector<64x400xbf16>
    %c0_1 = arith.constant 0 : index
    %c0_2 = arith.constant 0 : index
    %1 = vector.load %arg0[%c0_1, %c0_2] : memref<400x128xbf16, #tpu.memory_space<vmem>>, vector<400x128xbf16>
    %cst = arith.constant dense<0.000000e+00> : vector<64x128xf32>
    %2 = tpu.matmul %0, %1, %cst {dimension_numbers = #tpu.dot_dimension_numbers<[1], [0], [0], [1], [0, 0, 1, 1], [], []>} : vector<64x400xbf16>, vector<400x128xbf16>, vector<64x128xf32> -> vector<64x128xf32>
    %c0_3 = arith.constant 0 : index
    %c0_4 = arith.constant 0 : index
    %3 = vector.load %arg2[%c0_3, %c0_4] : memref<64x1xf32, #tpu.memory_space<vmem>>, vector<64x1xf32>
    %4 = vector.broadcast %3 : vector<64x1xf32> to vector<64x128xf32>
    %5 = arith.addf %2, %4 : vector<64x128xf32>
    %6 = arith.mulf %5, %5 : vector<64x128xf32>
    %7 = tpu.concatenate %5, %6 in 0 : vector<64x128xf32>, vector<64x128xf32> -> vector<128x128xf32>
    %cst_5 = arith.constant dense<0.000000e+00> : vector<128xf32>
    %8 = vector.multi_reduction <add>, %7, %cst_5 [1] : vector<128x128xf32> to vector<128xf32>
    %9 = vector.shape_cast %8 : vector<128xf32> to vector<128x1xf32>
    %cst_6 = arith.constant 7.812500e-03 : f32
    %10 = vector.broadcast %cst_6 : f32 to vector<128x1xf32>
    %11 = arith.mulf %9, %10 : vector<128x1xf32>
    %12 = vector.extract_strided_slice %11 {offsets = [0, 0], sizes = [64, 1], strides = [1, 1]} : vector<128x1xf32> to vector<64x1xf32>
    %13 = vector.extract_strided_slice %11 {offsets = [64, 0], sizes = [64, 1], strides = [1, 1]} : vector<128x1xf32> to vector<64x1xf32>
    %14 = arith.mulf %12, %12 : vector<64x1xf32>
    %15 = arith.subf %13, %14 : vector<64x1xf32>
    %16 = vector.broadcast %12 : vector<64x1xf32> to vector<64x128xf32>
    %17 = arith.subf %5, %16 : vector<64x128xf32>
    %cst_7 = arith.constant 9.99999974E-6 : f32
    %18 = vector.broadcast %cst_7 : f32 to vector<64x1xf32>
    %19 = arith.addf %15, %18 : vector<64x1xf32>
    %20 = math.rsqrt %19 : vector<64x1xf32>
    %21 = vector.broadcast %20 : vector<64x1xf32> to vector<64x128xf32>
    %22 = arith.mulf %17, %21 : vector<64x128xf32>
    %c0_8 = arith.constant 0 : index
    %c0_9 = arith.constant 0 : index
    %23 = vector.load %arg3[%c0_8, %c0_9] : memref<64x1xf32, #tpu.memory_space<vmem>>, vector<64x1xf32>
    %24 = vector.broadcast %23 : vector<64x1xf32> to vector<64x128xf32>
    %25 = arith.mulf %22, %24 : vector<64x128xf32>
    %c0_10 = arith.constant 0 : index
    %c0_11 = arith.constant 0 : index
    %26 = vector.load %arg4[%c0_10, %c0_11] : memref<64x1xf32, #tpu.memory_space<vmem>>, vector<64x1xf32>
    %27 = vector.broadcast %26 : vector<64x1xf32> to vector<64x128xf32>
    %28 = arith.addf %25, %27 : vector<64x128xf32>
    %29 = vector.extract_strided_slice %28 {offsets = [0, 0], sizes = [8, 128], strides = [1, 1]} : vector<64x128xf32> to vector<8x128xf32>
    %30 = vector.extract_strided_slice %28 {offsets = [8, 0], sizes = [8, 128], strides = [1, 1]} : vector<64x128xf32> to vector<8x128xf32>
    %31 = vector.extract_strided_slice %28 {offsets = [16, 0], sizes = [8, 128], strides = [1, 1]} : vector<64x128xf32> to vector<8x128xf32>
    %32 = vector.extract_strided_slice %28 {offsets = [24, 0], sizes = [8, 128], strides = [1, 1]} : vector<64x128xf32> to vector<8x128xf32>
    %33 = vector.extract_strided_slice %28 {offsets = [32, 0], sizes = [8, 128], strides = [1, 1]} : vector<64x128xf32> to vector<8x128xf32>
    %34 = vector.extract_strided_slice %28 {offsets = [40, 0], sizes = [8, 128], strides = [1, 1]} : vector<64x128xf32> to vector<8x128xf32>
    %35 = vector.extract_strided_slice %28 {offsets = [48, 0], sizes = [8, 128], strides = [1, 1]} : vector<64x128xf32> to vector<8x128xf32>
    %36 = vector.extract_strided_slice %28 {offsets = [56, 0], sizes = [8, 128], strides = [1, 1]} : vector<64x128xf32> to vector<8x128xf32>
    %c0_12 = arith.constant 0 : index
    %c0_13 = arith.constant 0 : index
    %37 = vector.load %arg5[%c0_12, %c0_13] : memref<8x128xf32, #tpu.memory_space<vmem>>, vector<8x128xf32>
    %c0_14 = arith.constant 0 : index
    %c0_15 = arith.constant 0 : index
    %38 = vector.load %arg6[%c0_14, %c0_15] : memref<16x128xf32, #tpu.memory_space<vmem>>, vector<16x128xf32>
    %39 = vector.extract_strided_slice %38 {offsets = [0, 0], sizes = [8, 128], strides = [1, 1]} : vector<16x128xf32> to vector<8x128xf32>
    %40 = arith.mulf %37, %39 : vector<8x128xf32>
    %41 = vector.extract_strided_slice %38 {offsets = [8, 0], sizes = [8, 128], strides = [1, 1]} : vector<16x128xf32> to vector<8x128xf32>
    %42 = arith.mulf %37, %41 : vector<8x128xf32>
    %43 = arith.addf %29, %40 : vector<8x128xf32>
    %44 = arith.addf %43, %33 : vector<8x128xf32>
    %cst_16 = arith.constant 0.000000e+00 : f32
    %45 = vector.broadcast %cst_16 : f32 to vector<8x128xf32>
    %46 = arith.subf %45, %44 : vector<8x128xf32>
    %47 = math.exp %46 : vector<8x128xf32>
    %cst_17 = arith.constant 1.000000e+00 : f32
    %48 = vector.broadcast %cst_17 : f32 to vector<8x128xf32>
    %49 = arith.addf %48, %47 : vector<8x128xf32>
    %50 = tpu.reciprocal %49 {approx = true} : vector<8x128xf32> -> vector<8x128xf32>
    %51 = arith.addf %31, %42 : vector<8x128xf32>
    %52 = arith.addf %51, %35 : vector<8x128xf32>
    %cst_18 = arith.constant 1.000000e+00 : f32
    %53 = vector.broadcast %cst_18 : f32 to vector<8x128xf32>
    %54 = arith.addf %52, %53 : vector<8x128xf32>
    %cst_19 = arith.constant 0.000000e+00 : f32
    %55 = vector.broadcast %cst_19 : f32 to vector<8x128xf32>
    %56 = arith.subf %55, %54 : vector<8x128xf32>
    %57 = math.exp %56 : vector<8x128xf32>
    %cst_20 = arith.constant 1.000000e+00 : f32
    %58 = vector.broadcast %cst_20 : f32 to vector<8x128xf32>
    %59 = arith.addf %58, %57 : vector<8x128xf32>
    %60 = tpu.reciprocal %59 {approx = true} : vector<8x128xf32> -> vector<8x128xf32>
    %61 = arith.addf %30, %34 : vector<8x128xf32>
    %62 = math.tanh %61 : vector<8x128xf32>
    %63 = arith.mulf %60, %37 : vector<8x128xf32>
    %64 = arith.mulf %50, %62 : vector<8x128xf32>
    %65 = arith.addf %63, %64 : vector<8x128xf32>
    %66 = arith.addf %32, %36 : vector<8x128xf32>
    %c0_21 = arith.constant 0 : index
    %c0_22 = arith.constant 0 : index
    %67 = vector.load %arg7[%c0_21, %c0_22] : memref<8x128xf32, #tpu.memory_space<vmem>>, vector<8x128xf32>
    %68 = arith.mulf %65, %67 : vector<8x128xf32>
    %69 = arith.addf %66, %68 : vector<8x128xf32>
    %cst_23 = arith.constant 0.000000e+00 : f32
    %70 = vector.broadcast %cst_23 : f32 to vector<8x128xf32>
    %71 = arith.subf %70, %69 : vector<8x128xf32>
    %72 = math.exp %71 : vector<8x128xf32>
    %cst_24 = arith.constant 1.000000e+00 : f32
    %73 = vector.broadcast %cst_24 : f32 to vector<8x128xf32>
    %74 = arith.addf %73, %72 : vector<8x128xf32>
    %75 = tpu.reciprocal %74 {approx = true} : vector<8x128xf32> -> vector<8x128xf32>
    %76 = math.tanh %65 : vector<8x128xf32>
    %77 = arith.mulf %75, %76 : vector<8x128xf32>
    %c0_25 = arith.constant 0 : index
    %c0_26 = arith.constant 0 : index
    %78 = vector.load %arg8[%c0_25, %c0_26] : memref<8x128xf32, #tpu.memory_space<vmem>>, vector<8x128xf32>
    tpu.vector_store %arg8[%c0_25, %c0_26], %77 {strides = array<i32>} : memref<8x128xf32, #tpu.memory_space<vmem>>, vector<8x128xf32>,
    %c0_27 = arith.constant 0 : index
    %c0_28 = arith.constant 0 : index
    %79 = vector.load %arg9[%c0_27, %c0_28] : memref<8x128xf32, #tpu.memory_space<vmem>>, vector<8x128xf32>
    tpu.vector_store %arg9[%c0_27, %c0_28], %65 {strides = array<i32>} : memref<8x128xf32, #tpu.memory_space<vmem>>, vector<8x128xf32>,
    return
  }
}

</mosaic_0001>

<llo_original>
// kernel: mimn_forward.1
$region0: #{mimn_forward.1}
  #allocation0 [shape = 'u32[]', space=smem, size = 0x4, offset = 0x4, fixed_abs, tag = 'smem constant byte address 0x4 - core index']
  #allocation1 [shape = 'u32[144,128]{1,0:T(1,128)}', space=vmem, size = 0x12000, scoped, tag = 'internal scratch']
  %s0 = inlined_call_operand.vmem [shape: bf16[400,128], index: 0, kind: input, shape index: {}]
  %s1 = inlined_call_operand.vmem [shape: bf16[64,400], index: 1, kind: input, shape index: {}]
  %s2 = inlined_call_operand.vmem [shape: f32[64,1], index: 2, kind: input, shape index: {}]
  %s3 = inlined_call_operand.vmem [shape: f32[64,1], index: 3, kind: input, shape index: {}]
  %s4 = inlined_call_operand.vmem [shape: f32[64,1], index: 4, kind: input, shape index: {}]
  %s5 = inlined_call_operand.vmem [shape: f32[8,128], index: 5, kind: input, shape index: {}, may-alias: {5,9}]
  %s6 = inlined_call_operand.vmem [shape: f32[16,128], index: 6, kind: input, shape index: {}]
  %s7 = inlined_call_operand.vmem [shape: f32[8,128], index: 7, kind: input, shape index: {}]
  %s8 = inlined_call_operand.vmem [shape: f32[8,128], index: 8, kind: output, shape index: {0}]
  %s9 = inlined_call_operand.vmem [shape: f32[8,128], index: 9, kind: output, shape index: {1}, may-alias: {5,9}]
  %10 = xla_tuple %s8, %s9
  %s11 = sld [smem:[#allocation0]]
  $region50: #{mimn_forward.1} parent=0
    _
  %s13 = ssub.s32 1, %s11
  %s14 = scalar_select 0, %s13, %s11
  // Predicated region
  $region2: #{mimn_forward.1} parent=0 // pred_check
    _
  $region3: #{mimn_forward.1} parent=0 // pred_check_branch
    %16 = sbr.rel (0) target = $region5
  $region4: #{mimn_forward.1} parent=0 // pred_region
    _
  $region5: #{mimn_forward.1} parent=0 // pred_fallthru
    _
  // Predicated region
  $region6: #{mimn_forward.1} parent=0 // pred_check
    _
  $region7: #{mimn_forward.1} parent=0 // pred_check_branch
    %18 = sbr.rel (0) target = $region9
  $region8: #{mimn_forward.1} parent=0 // pred_region
    _
  $region9: #{mimn_forward.1} parent=0 // pred_fallthru
    _
  // Predicated region
  $region10: #{mimn_forward.1} parent=0 // pred_check
    _
  $region11: #{mimn_forward.1} parent=0 // pred_check_branch
    %20 = sbr.rel (0) target = $region13
  $region12: #{mimn_forward.1} parent=0 // pred_region
    _
  $region13: #{mimn_forward.1} parent=0 // pred_fallthru
    _
  // Predicated region
  $region14: #{mimn_forward.1} parent=0 // pred_check
    _
  $region15: #{mimn_forward.1} parent=0 // pred_check_branch
    %22 = sbr.rel (0) target = $region17
  $region16: #{mimn_forward.1} parent=0 // pred_region
    _
  $region17: #{mimn_forward.1} parent=0 // pred_fallthru
    _
  // Predicated region
  $region18: #{mimn_forward.1} parent=0 // pred_check
    _
  $region19: #{mimn_forward.1} parent=0 // pred_check_branch
    %24 = sbr.rel (0) target = $region21
  $region20: #{mimn_forward.1} parent=0 // pred_region
    _
  $region21: #{mimn_forward.1} parent=0 // pred_fallthru
    _
  // Predicated region
  $region22: #{mimn_forward.1} parent=0 // pred_check
    _
  $region23: #{mimn_forward.1} parent=0 // pred_check_branch
    %26 = sbr.rel (0) target = $region25
  $region24: #{mimn_forward.1} parent=0 // pred_region
    _
  $region25: #{mimn_forward.1} parent=0 // pred_fallthru
    _
  // Predicated region
  $region26: #{mimn_forward.1} parent=0 // pred_check
    _
  $region27: #{mimn_forward.1} parent=0 // pred_check_branch
    %28 = sbr.rel (0) target = $region29
  $region28: #{mimn_forward.1} parent=0 // pred_region
    _
  $region29: #{mimn_forward.1} parent=0 // pred_fallthru
    _
  // Predicated region
  $region30: #{mimn_forward.1} parent=0 // pred_check
    _
  $region31: #{mimn_forward.1} parent=0 // pred_check_branch
    %30 = sbr.rel (0) target = $region33
  $region32: #{mimn_forward.1} parent=0 // pred_region
    _
  $region33: #{mimn_forward.1} parent=0 // pred_fallthru
    _
  %v32 = vld [vmem:[%s1] sm:$0xff]
  %v33 = vld [vmem:[%s1 + $0x8] sm:$0xff]
  %v34 = vld [vmem:[%s1 + $0x10] sm:$0xff]
  %v35 = vld [vmem:[%s1 + $0x18] sm:$0xff]
  %v36 = vld [vmem:[%s1 + $0x20] sm:$0xff]
  %v37 = vld [vmem:[%s1 + $0x28] sm:$0xff]
  %v38 = vld [vmem:[%s1 + $0x30] sm:$0xff]
  %v39 = vld [vmem:[%s1 + $0x38] sm:$0xff]
  %v40 = vld [vmem:[%s1 + $0x40] sm:$0xff]
  %v41 = vld [vmem:[%s1 + $0x48] sm:$0xff]
  %v42 = vld [vmem:[%s1 + $0x50] sm:$0xff]
  %v43 = vld [vmem:[%s1 + $0x58] sm:$0xff]
  %v44 = vld [vmem:[%s1 + $0x60] sm:$0xff]
  %v45 = vld [vmem:[%s1 + $0x68] sm:$0xff]
  %v46 = vld [vmem:[%s1 + $0x70] sm:$0xff]
  %v47 = vld [vmem:[%s1 + $0x78] sm:$0xff]
  %v48 = vld [vmem:[%s0] sm:$0xf]
  %v49 = vld [vmem:[%s0 + $0x4] sm:$0xf]
  %v50 = vld [vmem:[%s0 + $0x8] sm:$0xf]
  %v51 = vld [vmem:[%s0 + $0xc] sm:$0xf]
  %v52 = vld [vmem:[%s0 + $0x10] sm:$0xf]
  %v53 = vld [vmem:[%s0 + $0x14] sm:$0xf]
  %v54 = vld [vmem:[%s0 + $0x18] sm:$0xf]
  %v55 = vld [vmem:[%s0 + $0x1c] sm:$0xf]
  %v56 = vld [vmem:[%s0 + $0x20] sm:$0xf]
  %v57 = vld [vmem:[%s0 + $0x24] sm:$0xf]
  %v58 = vld [vmem:[%s0 + $0x28] sm:$0xf]
  %v59 = vld [vmem:[%s0 + $0x2c] sm:$0xf]
  %v60 = vld [vmem:[%s0 + $0x30] sm:$0xf]
  %v61 = vld [vmem:[%s0 + $0x34] sm:$0xf]
  %v62 = vld [vmem:[%s0 + $0x38] sm:$0xf]
  %v63 = vld [vmem:[%s0 + $0x3c] sm:$0xf]
  %v64 = vld [vmem:[%s0 + $0x40] sm:$0xf]
  %v65 = vld [vmem:[%s0 + $0x44] sm:$0xf]
  %v66 = vld [vmem:[%s0 + $0x48] sm:$0xf]
  %v67 = vld [vmem:[%s0 + $0x4c] sm:$0xf]
  %v68 = vld [vmem:[%s0 + $0x50] sm:$0xf]
  %v69 = vld [vmem:[%s0 + $0x54] sm:$0xf]
  %v70 = vld [vmem:[%s0 + $0x58] sm:$0xf]
  %v71 = vld [vmem:[%s0 + $0x5c] sm:$0xf]
  %v72 = vld [vmem:[%s0 + $0x60] sm:$0xf]
  %v73 = vld [vmem:[%s0 + $0x64] sm:$0xf]
  %v74 = vld [vmem:[%s0 + $0x68] sm:$0xf]
  %v75 = vld [vmem:[%s0 + $0x6c] sm:$0xf]
  %v76 = vld [vmem:[%s0 + $0x70] sm:$0xf]
  %v77 = vld [vmem:[%s0 + $0x74] sm:$0xf]
  %v78 = vld [vmem:[%s0 + $0x78] sm:$0xf]
  %v79 = vld [vmem:[%s0 + $0x7c] sm:$0xf]
  %v80 = vld [vmem:[%s0 + $0x80] sm:$0xf]
  %v81 = vld [vmem:[%s0 + $0x84] sm:$0xf]
  %v82 = vld [vmem:[%s0 + $0x88] sm:$0xf]
  %v83 = vld [vmem:[%s0 + $0x8c] sm:$0xf]
  %v84 = vld [vmem:[%s0 + $0x90] sm:$0xf]
  %v85 = vld [vmem:[%s0 + $0x94] sm:$0xf]
  %v86 = vld [vmem:[%s0 + $0x98] sm:$0xf]
  %v87 = vld [vmem:[%s0 + $0x9c] sm:$0xf]
  %v88 = vld [vmem:[%s0 + $0xa0] sm:$0xf]
  %v89 = vld [vmem:[%s0 + $0xa4] sm:$0xf]
  %v90 = vld [vmem:[%s0 + $0xa8] sm:$0xf]
  %v91 = vld [vmem:[%s0 + $0xac] sm:$0xf]
  %v92 = vld [vmem:[%s0 + $0xb0] sm:$0xf]
  %v93 = vld [vmem:[%s0 + $0xb4] sm:$0xf]
  %v94 = vld [vmem:[%s0 + $0xb8] sm:$0xf]
  %v95 = vld [vmem:[%s0 + $0xbc] sm:$0xf]
  %v96 = vld [vmem:[%s0 + $0xc0] sm:$0xf]
  %v97 = vld [vmem:[%s0 + $0xc4] sm:$0xf]
  %v98 = vld [vmem:[%s2] sm:$0xff]
  %v99 = vld [vmem:[%s2 + $0x8] sm:$0xff]
  %v100 = vld [vmem:[%s2 + $0x10] sm:$0xff]
  %v101 = vld [vmem:[%s2 + $0x18] sm:$0xff]
  %v102 = vld [vmem:[%s2 + $0x20] sm:$0xff]
  %v103 = vld [vmem:[%s2 + $0x28] sm:$0xff]
  %v104 = vld [vmem:[%s2 + $0x30] sm:$0xff]
  %v105 = vld [vmem:[%s2 + $0x38] sm:$0xff]
  %107 = vset.pattern.permute.xlu0 0
  %108 = vperm.xlu0 %107, %v98
  %v109 = vpop.permute.xlu0 %108
  %112 = vset.pattern.permute.xlu0 0
  %113 = vperm.xlu0 %112, %v99
  %v114 = vpop.permute.xlu0 %113
  %117 = vset.pattern.permute.xlu0 0
  %118 = vperm.xlu0 %117, %v100
  %v119 = vpop.permute.xlu0 %118
  %122 = vset.pattern.permute.xlu0 0
  %123 = vperm.xlu0 %122, %v101
  %v124 = vpop.permute.xlu0 %123
  %127 = vset.pattern.permute.xlu0 0
  %128 = vperm.xlu0 %127, %v102
  %v129 = vpop.permute.xlu0 %128
  %132 = vset.pattern.permute.xlu0 0
  %133 = vperm.xlu0 %132, %v103
  %v134 = vpop.permute.xlu0 %133
  %137 = vset.pattern.permute.xlu0 0
  %138 = vperm.xlu0 %137, %v104
  %v139 = vpop.permute.xlu0 %138
  %142 = vset.pattern.permute.xlu0 0
  %143 = vperm.xlu0 %142, %v105
  %v144 = vpop.permute.xlu0 %143
  %v162 = vunpack.c.l.b16 %v32
  %v163 = vunpack.c.h.b16 %v32
  %v164 = vunpack.c.l.b16 %v33
  %v165 = vunpack.c.h.b16 %v33
  %v166 = vunpack.c.l.b16 %v34
  %v167 = vunpack.c.h.b16 %v34
  %v168 = vunpack.c.l.b16 %v35
  %v169 = vunpack.c.h.b16 %v35
  %v170 = vunpack.c.l.b16 %v36
  %v171 = vunpack.c.h.b16 %v36
  %v172 = vunpack.c.l.b16 %v37
  %v173 = vunpack.c.h.b16 %v37
  %v174 = vunpack.c.l.b16 %v38
  %v175 = vunpack.c.h.b16 %v38
  %v176 = vunpack.c.l.b16 %v39
  %v177 = vunpack.c.h.b16 %v39
  %v178 = vunpack.c.l.b16 %v40
  %v179 = vunpack.c.h.b16 %v40
  %v180 = vunpack.c.l.b16 %v41
  %v181 = vunpack.c.h.b16 %v41
  %v182 = vunpack.c.l.b16 %v42
  %v183 = vunpack.c.h.b16 %v42
  %v184 = vunpack.c.l.b16 %v43
  %v185 = vunpack.c.h.b16 %v43
  %v186 = vunpack.c.l.b16 %v44
  %v187 = vunpack.c.h.b16 %v44
  %v188 = vunpack.c.l.b16 %v45
  %v189 = vunpack.c.h.b16 %v45
  %v190 = vunpack.c.l.b16 %v46
  %v191 = vunpack.c.h.b16 %v46
  %v192 = vunpack.c.l.b16 %v47
  %v193 = vunpack.c.h.b16 %v47
  %v194 = vpack.c.b16 %v166, %v162
  %v195 = vpack.c.b16 %v167, %v163
  %v196 = vpack.c.b16 %v168, %v164
  %v197 = vpack.c.b16 %v169, %v165
  %v198 = vpack.c.b16 %v174, %v170
  %v199 = vpack.c.b16 %v175, %v171
  %v200 = vpack.c.b16 %v176, %v172
  %v201 = vpack.c.b16 %v177, %v173
  %v202 = vpack.c.b16 %v182, %v178
  %v203 = vpack.c.b16 %v183, %v179
  %v204 = vpack.c.b16 %v184, %v180
  %v205 = vpack.c.b16 %v185, %v181
  %v206 = vpack.c.b16 %v190, %v186
  %v207 = vpack.c.b16 %v191, %v187
  %v208 = vpack.c.b16 %v192, %v188
  %v209 = vpack.c.b16 %v193, %v189
  %v272 = vunpack.c.l.b16 %v48
  %v273 = vunpack.c.l.b16 %v49
  %v274 = vunpack.c.l.b16 %v50
  %v275 = vunpack.c.l.b16 %v51
  %v276 = vunpack.c.l.b16 %v52
  %v277 = vunpack.c.l.b16 %v53
  %v278 = vunpack.c.l.b16 %v54
  %v279 = vunpack.c.l.b16 %v55
  %v280 = vunpack.c.l.b16 %v56
  %v281 = vunpack.c.l.b16 %v57
  %v282 = vunpack.c.l.b16 %v58
  %v283 = vunpack.c.l.b16 %v59
  %v284 = vunpack.c.l.b16 %v60
  %v285 = vunpack.c.l.b16 %v61
  %v286 = vunpack.c.l.b16 %v62
  %v287 = vunpack.c.l.b16 %v63
  %v288 = vunpack.c.l.b16 %v64
  %v289 = vunpack.c.l.b16 %v65
  %v290 = vunpack.c.l.b16 %v66
  %v291 = vunpack.c.l.b16 %v67
  %v292 = vunpack.c.l.b16 %v68
  %v293 = vunpack.c.l.b16 %v69
  %v294 = vunpack.c.l.b16 %v70
  %v295 = vunpack.c.l.b16 %v71
  %v296 = vunpack.c.l.b16 %v72
  %v297 = vunpack.c.l.b16 %v73
  %v298 = vunpack.c.l.b16 %v74
  %v299 = vunpack.c.l.b16 %v75
  %v300 = vunpack.c.l.b16 %v76
  %v301 = vunpack.c.l.b16 %v77
  %v302 = vunpack.c.l.b16 %v78
  %v303 = vunpack.c.l.b16 %v79
  %v304 = vunpack.c.l.b16 %v80
  %v305 = vunpack.c.l.b16 %v81
  %v306 = vunpack.c.l.b16 %v82
  %v307 = vunpack.c.l.b16 %v83
  %v308 = vunpack.c.l.b16 %v84
  %v309 = vunpack.c.l.b16 %v85
  %v310 = vunpack.c.l.b16 %v86
  %v311 = vunpack.c.l.b16 %v87
  %v312 = vunpack.c.l.b16 %v88
  %v313 = vunpack.c.l.b16 %v89
  %v314 = vunpack.c.l.b16 %v90
  %v315 = vunpack.c.l.b16 %v91
  %v316 = vunpack.c.l.b16 %v92
  %v317 = vunpack.c.l.b16 %v93
  %v318 = vunpack.c.l.b16 %v94
  %v319 = vunpack.c.l.b16 %v95
  %v320 = vunpack.c.l.b16 %v96
  %v321 = vunpack.c.l.b16 %v97
  %v322 = vpack.c.b16 %v273, %v272
  %v323 = vpack.c.b16 %v275, %v274
  %v324 = vpack.c.b16 %v277, %v276
  %v325 = vpack.c.b16 %v279, %v278
  %v326 = vpack.c.b16 %v281, %v280
  %v327 = vpack.c.b16 %v283, %v282
  %v328 = vpack.c.b16 %v285, %v284
  %v329 = vpack.c.b16 %v287, %v286
  %v330 = vpack.c.b16 %v289, %v288
  %v331 = vpack.c.b16 %v291, %v290
  %v332 = vpack.c.b16 %v293, %v292
  %v333 = vpack.c.b16 %v295, %v294
  %v334 = vpack.c.b16 %v297, %v296
  %v335 = vpack.c.b16 %v299, %v298
  %v336 = vpack.c.b16 %v301, %v300
  %v337 = vpack.c.b16 %v303, %v302
  %v338 = vpack.c.b16 %v305, %v304
  %v339 = vpack.c.b16 %v307, %v306
  %v340 = vpack.c.b16 %v309, %v308
  %v341 = vpack.c.b16 %v311, %v310
  %v342 = vpack.c.b16 %v313, %v312
  %v343 = vpack.c.b16 %v315, %v314
  %v344 = vpack.c.b16 %v317, %v316
  %v345 = vpack.c.b16 %v319, %v318
  %v346 = vpack.c.b16 %v321, %v320
  %vm372 = vcmask 130048
  %v374 = vsel %vm372, %v197, 0
  %v377 = vsel %vm372, %v201, 0
  %v380 = vsel %vm372, %v205, 0
  %v383 = vsel %vm372, %v209, 0
  %385 = vmatprep.subr.bf16.mxu0 0
  %386 = vmatpush1.bf16.msra.mxu0 %v322
  %387 = vmatprep.subr.bf16.mxu0 0
  %388 = vmatpush1.bf16.msra.mxu0 %v323
  %389 = vmatprep.subr.bf16.mxu0 0
  %390 = vmatpush1.bf16.msra.mxu0 %v324
  %391 = vmatprep.subr.bf16.mxu0 0
  %392 = vmatpush1.bf16.msra.mxu0 %v325
  %393 = vmatprep.subr.bf16.mxu0 0
  %394 = vmatpush1.bf16.msra.mxu0 %v326
  %395 = vmatprep.subr.bf16.mxu0 0
  %396 = vmatpush1.bf16.msra.mxu0 %v327
  %397 = vmatprep.subr.bf16.mxu0 0
  %398 = vmatpush1.bf16.msra.mxu0 %v328
  %399 = vmatprep.subr.bf16.mxu0 0
  %400 = vmatpush1.bf16.msra.mxu0 %v329
  %401 = vmatprep.subr.bf16.mxu0 0
  %402 = vmatpush1.bf16.msra.mxu0 %v330
  %403 = vmatprep.subr.bf16.mxu0 0
  %404 = vmatpush1.bf16.msra.mxu0 %v331
  %405 = vmatprep.subr.bf16.mxu0 0
  %406 = vmatpush1.bf16.msra.mxu0 %v332
  %407 = vmatprep.subr.bf16.mxu0 0
  %408 = vmatpush1.bf16.msra.mxu0 %v333
  %409 = vmatprep.subr.bf16.mxu0 0
  %410 = vmatpush1.bf16.msra.mxu0 %v334
  %411 = vmatprep.subr.bf16.mxu0 0
  %412 = vmatpush1.bf16.msra.mxu0 %v335
  %413 = vmatprep.subr.bf16.mxu0 0
  %414 = vmatpush1.bf16.msra.mxu0 %v336
  %415 = vmatprep.subr.bf16.mxu0 0
  %416 = vmatpush1.bf16.msra.mxu0 %v337
  %417 = vmatprep.mubr.bf16.mxu0 %v195
  %418 = vmatmul.mubr.bf16.gmra.mrb[0].mxu0 %v194
  %v419 = vpop.f32.mrb[0].mxu0
  %v420 = vadd.f32 %v109, %v419
  %v421 = vpop.f32.mrb[0].mxu0
  %v422 = vpop.f32.mrb[0].mxu0
  %v423 = vadd.f32 %v114, %v422
  %v424 = vpop.f32.mrb[0].mxu0
  %425 = vmatprep.mubr.bf16.mxu0 %v199
  %426 = vmatmul.mubr.bf16.gmra.mrb[0].mxu0 %v198
  %v427 = vpop.f32.mrb[0].mxu0
  %v428 = vadd.f32 %v119, %v427
  %v429 = vpop.f32.mrb[0].mxu0
  %v430 = vpop.f32.mrb[0].mxu0
  %v431 = vadd.f32 %v124, %v430
  %v432 = vpop.f32.mrb[0].mxu0
  %433 = vmatprep.mubr.bf16.mxu0 %v203
  %434 = vmatmul.mubr.bf16.gmra.mrb[0].mxu0 %v202
  %v435 = vpop.f32.mrb[0].mxu0
  %v436 = vadd.f32 %v129, %v435
  %v437 = vpop.f32.mrb[0].mxu0
  %v438 = vpop.f32.mrb[0].mxu0
  %v439 = vadd.f32 %v134, %v438
  %v440 = vpop.f32.mrb[0].mxu0
  %441 = vmatprep.mubr.bf16.mxu0 %v207
  %442 = vmatmul.mubr.bf16.gmra.mrb[0].mxu0 %v206
  %v443 = vpop.f32.mrb[0].mxu0
  %v444 = vadd.f32 %v139, %v443
  %v445 = vpop.f32.mrb[0].mxu0
  %v446 = vpop.f32.mrb[0].mxu0
  %v447 = vadd.f32 %v144, %v446
  %v448 = vpop.f32.mrb[0].mxu0
  %449 = vdwg.mxu0
  %450 = vmatprep.subr.bf16.mxu0 0
  %451 = vmatpush1.bf16.msra.mxu0 %v338
  %452 = vmatprep.subr.bf16.mxu0 0
  %453 = vmatpush1.bf16.msra.mxu0 %v339
  %454 = vmatprep.subr.bf16.mxu0 0
  %455 = vmatpush1.bf16.msra.mxu0 %v340
  %456 = vmatprep.subr.bf16.mxu0 0
  %457 = vmatpush1.bf16.msra.mxu0 %v341
  %458 = vmatprep.subr.bf16.mxu0 0
  %459 = vmatpush1.bf16.msra.mxu0 %v342
  %460 = vmatprep.subr.bf16.mxu0 0
  %461 = vmatpush1.bf16.msra.mxu0 %v343
  %462 = vmatprep.subr.bf16.mxu0 0
  %463 = vmatpush1.bf16.msra.mxu0 %v344
  %464 = vmatprep.subr.bf16.mxu0 0
  %465 = vmatpush1.bf16.msra.mxu0 %v345
  %466 = vmatprep.subr.bf16.mxu0 0
  %467 = vmatpush1.bf16.msra.mxu0 %v346
  %468 = vmatprep.subr.bf16.mxu0 0
  %469 = vmatpush1.bf16.msra.mxu0 0
  %470 = vmatprep.subr.bf16.mxu0 0
  %471 = vmatpush1.bf16.msra.mxu0 0
  %472 = vmatprep.subr.bf16.mxu0 0
  %473 = vmatpush1.bf16.msra.mxu0 0
  %474 = vmatprep.subr.bf16.mxu0 0
  %475 = vmatpush1.bf16.msra.mxu0 0
  %476 = vmatprep.subr.bf16.mxu0 0
  %477 = vmatpush1.bf16.msra.mxu0 0
  %478 = vmatprep.subr.bf16.mxu0 0
  %479 = vmatpush1.bf16.msra.mxu0 0
  %480 = vmatprep.subr.bf16.mxu0 0
  %481 = vmatpush1.bf16.msra.mxu0 0
  %482 = vmatprep.mubr.bf16.mxu0 %v374
  %483 = vmatmul.mubr.bf16.gmra.mrb[0].mxu0 %v196
  %v484 = vpop.f32.mrb[0].mxu0
  %v485 = vadd.f32 %v420, %v484
  %v486 = vpop.f32.mrb[0].mxu0
  %v487 = vpop.f32.mrb[0].mxu0
  %v488 = vadd.f32 %v423, %v487
  %v489 = vpop.f32.mrb[0].mxu0
  %490 = vmatprep.mubr.bf16.mxu0 %v377
  %491 = vmatmul.mubr.bf16.gmra.mrb[0].mxu0 %v200
  %v492 = vpop.f32.mrb[0].mxu0
  %v493 = vadd.f32 %v428, %v492
  %v494 = vpop.f32.mrb[0].mxu0
  %v495 = vpop.f32.mrb[0].mxu0
  %v496 = vadd.f32 %v431, %v495
  %v497 = vpop.f32.mrb[0].mxu0
  %498 = vmatprep.mubr.bf16.mxu0 %v380
  %499 = vmatmul.mubr.bf16.gmra.mrb[0].mxu0 %v204
  %v500 = vpop.f32.mrb[0].mxu0
  %v501 = vadd.f32 %v436, %v500
  %v502 = vpop.f32.mrb[0].mxu0
  %v503 = vpop.f32.mrb[0].mxu0
  %v504 = vadd.f32 %v439, %v503
  %v505 = vpop.f32.mrb[0].mxu0
  %506 = vmatprep.mubr.bf16.mxu0 %v383
  %507 = vmatmul.mubr.bf16.gmra.mrb[0].mxu0 %v208
  %v508 = vpop.f32.mrb[0].mxu0
  %v509 = vadd.f32 %v444, %v508
  %v510 = vpop.f32.mrb[0].mxu0
  %v511 = vpop.f32.mrb[0].mxu0
  %v512 = vadd.f32 %v447, %v511
  %v513 = vpop.f32.mrb[0].mxu0
  %514 = vdwg.mxu0
  %v515 = vmul.f32 %v485, %v485
  %v516 = vmul.f32 %v488, %v488
  %v517 = vmul.f32 %v493, %v493
  %v518 = vmul.f32 %v496, %v496
  %v519 = vmul.f32 %v501, %v501
  %v520 = vmul.f32 %v504, %v504
  %v521 = vmul.f32 %v509, %v509
  %v522 = vmul.f32 %v512, %v512
  %523 = vadd.xlane.f32.xlu0 %v485
  %v524 = vpop.xlane.xlu0 %523
  %525 = vadd.xlane.f32.xlu0 %v488
  %v526 = vpop.xlane.xlu0 %525
  %527 = vadd.xlane.f32.xlu0 %v493
  %v528 = vpop.xlane.xlu0 %527
  %529 = vadd.xlane.f32.xlu0 %v496
  %v530 = vpop.xlane.xlu0 %529
  %531 = vadd.xlane.f32.xlu0 %v501
  %v532 = vpop.xlane.xlu0 %531
  %533 = vadd.xlane.f32.xlu0 %v504
  %v534 = vpop.xlane.xlu0 %533
  %535 = vadd.xlane.f32.xlu0 %v509
  %v536 = vpop.xlane.xlu0 %535
  %537 = vadd.xlane.f32.xlu0 %v512
  %v538 = vpop.xlane.xlu0 %537
  %539 = vadd.xlane.f32.xlu0 %v515
  %v540 = vpop.xlane.xlu0 %539
  %541 = vadd.xlane.f32.xlu0 %v516
  %v542 = vpop.xlane.xlu0 %541
  %543 = vadd.xlane.f32.xlu0 %v517
  %v544 = vpop.xlane.xlu0 %543
  %545 = vadd.xlane.f32.xlu0 %v518
  %v546 = vpop.xlane.xlu0 %545
  %547 = vadd.xlane.f32.xlu0 %v519
  %v548 = vpop.xlane.xlu0 %547
  %549 = vadd.xlane.f32.xlu0 %v520
  %v550 = vpop.xlane.xlu0 %549
  %551 = vadd.xlane.f32.xlu0 %v521
  %v552 = vpop.xlane.xlu0 %551
  %553 = vadd.xlane.f32.xlu0 %v522
  %v554 = vpop.xlane.xlu0 %553
  %v555 = vmul.f32 %v524, 0.0078125
  %v556 = vmul.f32 %v526, 0.0078125
  %v557 = vmul.f32 %v528, 0.0078125
  %v558 = vmul.f32 %v530, 0.0078125
  %v559 = vmul.f32 %v532, 0.0078125
  %v560 = vmul.f32 %v534, 0.0078125
  %v561 = vmul.f32 %v536, 0.0078125
  %v562 = vmul.f32 %v538, 0.0078125
  %v563 = vmul.f32 %v540, 0.0078125
  %v564 = vmul.f32 %v542, 0.0078125
  %v565 = vmul.f32 %v544, 0.0078125
  %v566 = vmul.f32 %v546, 0.0078125
  %v567 = vmul.f32 %v548, 0.0078125
  %v568 = vmul.f32 %v550, 0.0078125
  %v569 = vmul.f32 %v552, 0.0078125
  %v570 = vmul.f32 %v554, 0.0078125
  %v571 = vmul.f32 %v555, %v555
  %v572 = vmul.f32 %v556, %v556
  %v573 = vmul.f32 %v557, %v557
  %v574 = vmul.f32 %v558, %v558
  %v575 = vmul.f32 %v559, %v559
  %v576 = vmul.f32 %v560, %v560
  %v577 = vmul.f32 %v561, %v561
  %v578 = vmul.f32 %v562, %v562
  %v579 = vsub.f32 %v563, %v571
  %v580 = vsub.f32 %v564, %v572
  %v581 = vsub.f32 %v565, %v573
  %v582 = vsub.f32 %v566, %v574
  %v583 = vsub.f32 %v567, %v575
  %v584 = vsub.f32 %v568, %v576
  %v585 = vsub.f32 %v569, %v577
  %v586 = vsub.f32 %v570, %v578
  %v587 = vsub.f32 %v485, %v555
  %v588 = vsub.f32 %v488, %v556
  %v589 = vsub.f32 %v493, %v557
  %v590 = vsub.f32 %v496, %v558
  %v591 = vsub.f32 %v501, %v559
  %v592 = vsub.f32 %v504, %v560
  %v593 = vsub.f32 %v509, %v561
  %v594 = vsub.f32 %v512, %v562
  %v595 = vadd.f32 %v579, 1e-05
  %v596 = vadd.f32 %v580, 1e-05
  %v597 = vadd.f32 %v581, 1e-05
  %v598 = vadd.f32 %v582, 1e-05
  %v599 = vadd.f32 %v583, 1e-05
  %v600 = vadd.f32 %v584, 1e-05
  %v601 = vadd.f32 %v585, 1e-05
  %v602 = vadd.f32 %v586, 1e-05
  %v603 = vrsqrt.pop %v595
  %v604 = vrsqrt.pop %v596
  %v605 = vrsqrt.pop %v597
  %v606 = vrsqrt.pop %v598
  %v607 = vrsqrt.pop %v599
  %v608 = vrsqrt.pop %v600
  %v609 = vrsqrt.pop %v601
  %v610 = vrsqrt.pop %v602
  %v611 = vmul.f32 %v587, %v603
  %v612 = vmul.f32 %v588, %v604
  %v613 = vmul.f32 %v589, %v605
  %v614 = vmul.f32 %v590, %v606
  %v615 = vmul.f32 %v591, %v607
  %v616 = vmul.f32 %v592, %v608
  %v617 = vmul.f32 %v593, %v609
  %v618 = vmul.f32 %v594, %v610
  %v619 = vld [vmem:[%s3] sm:$0xff]
  %v620 = vld [vmem:[%s3 + $0x8] sm:$0xff]
  %v621 = vld [vmem:[%s3 + $0x10] sm:$0xff]
  %v622 = vld [vmem:[%s3 + $0x18] sm:$0xff]
  %v623 = vld [vmem:[%s3 + $0x20] sm:$0xff]
  %v624 = vld [vmem:[%s3 + $0x28] sm:$0xff]
  %v625 = vld [vmem:[%s3 + $0x30] sm:$0xff]
  %v626 = vld [vmem:[%s3 + $0x38] sm:$0xff]
  %628 = vset.pattern.permute.xlu0 0
  %629 = vperm.xlu0 %628, %v619
  %v630 = vpop.permute.xlu0 %629
  %633 = vset.pattern.permute.xlu0 0
  %634 = vperm.xlu0 %633, %v620
  %v635 = vpop.permute.xlu0 %634
  %638 = vset.pattern.permute.xlu0 0
  %639 = vperm.xlu0 %638, %v621
  %v640 = vpop.permute.xlu0 %639
  %643 = vset.pattern.permute.xlu0 0
  %644 = vperm.xlu0 %643, %v622
  %v645 = vpop.permute.xlu0 %644
  %648 = vset.pattern.permute.xlu0 0
  %649 = vperm.xlu0 %648, %v623
  %v650 = vpop.permute.xlu0 %649
  %653 = vset.pattern.permute.xlu0 0
  %654 = vperm.xlu0 %653, %v624
  %v655 = vpop.permute.xlu0 %654
  %658 = vset.pattern.permute.xlu0 0
  %659 = vperm.xlu0 %658, %v625
  %v660 = vpop.permute.xlu0 %659
  %663 = vset.pattern.permute.xlu0 0
  %664 = vperm.xlu0 %663, %v626
  %v665 = vpop.permute.xlu0 %664
  %v667 = vmul.f32 %v611, %v630
  %v668 = vmul.f32 %v612, %v635
  %v669 = vmul.f32 %v613, %v640
  %v670 = vmul.f32 %v614, %v645
  %v671 = vmul.f32 %v615, %v650
  %v672 = vmul.f32 %v616, %v655
  %v673 = vmul.f32 %v617, %v660
  %v674 = vmul.f32 %v618, %v665
  %v675 = vld [vmem:[%s4] sm:$0xff]
  %v676 = vld [vmem:[%s4 + $0x8] sm:$0xff]
  %v677 = vld [vmem:[%s4 + $0x10] sm:$0xff]
  %v678 = vld [vmem:[%s4 + $0x18] sm:$0xff]
  %v679 = vld [vmem:[%s4 + $0x20] sm:$0xff]
  %v680 = vld [vmem:[%s4 + $0x28] sm:$0xff]
  %v681 = vld [vmem:[%s4 + $0x30] sm:$0xff]
  %v682 = vld [vmem:[%s4 + $0x38] sm:$0xff]
  %684 = vset.pattern.permute.xlu0 0
  %685 = vperm.xlu0 %684, %v675
  %v686 = vpop.permute.xlu0 %685
  %689 = vset.pattern.permute.xlu0 0
  %690 = vperm.xlu0 %689, %v676
  %v691 = vpop.permute.xlu0 %690
  %694 = vset.pattern.permute.xlu0 0
  %695 = vperm.xlu0 %694, %v677
  %v696 = vpop.permute.xlu0 %695
  %699 = vset.pattern.permute.xlu0 0
  %700 = vperm.xlu0 %699, %v678
  %v701 = vpop.permute.xlu0 %700
  %704 = vset.pattern.permute.xlu0 0
  %705 = vperm.xlu0 %704, %v679
  %v706 = vpop.permute.xlu0 %705
  %709 = vset.pattern.permute.xlu0 0
  %710 = vperm.xlu0 %709, %v680
  %v711 = vpop.permute.xlu0 %710
  %714 = vset.pattern.permute.xlu0 0
  %715 = vperm.xlu0 %714, %v681
  %v716 = vpop.permute.xlu0 %715
  %719 = vset.pattern.permute.xlu0 0
  %720 = vperm.xlu0 %719, %v682
  %v721 = vpop.permute.xlu0 %720
  %v723 = vadd.f32 %v667, %v686
  %v724 = vadd.f32 %v668, %v691
  %v725 = vadd.f32 %v669, %v696
  %v726 = vadd.f32 %v670, %v701
  %v727 = vadd.f32 %v671, %v706
  %v728 = vadd.f32 %v672, %v711
  %v729 = vadd.f32 %v673, %v716
  %v730 = vadd.f32 %v674, %v721
  %v731 = vld [vmem:[%s5] sm:$0xff]
  %v732 = vld [vmem:[%s6] sm:$0xff]
  %v733 = vld [vmem:[%s6 + $0x8] sm:$0xff]
  %v734 = vmul.f32 %v731, %v732
  %v735 = vmul.f32 %v731, %v733
  %v736 = vadd.f32 %v723, %v734
  %v737 = vadd.f32 %v736, %v727
  %v738 = vsub.f32 0.0, %v737
  %v739 = vmul.f32 %v738, 1.442695
  %v740 = vpow.pop %v739
  %v741 = vadd.f32 %v740, 1.0
  %v742 = vrcp.pop %v741
  %v743 = vadd.f32 %v725, %v735
  %v744 = vadd.f32 %v743, %v729
  %v745 = vadd.f32 %v744, 1.0
  %v746 = vsub.f32 0.0, %v745
  %v747 = vmul.f32 %v746, 1.442695
  %v748 = vpow.pop %v747
  %v749 = vadd.f32 %v748, 1.0
  %v750 = vrcp.pop %v749
  %v751 = vadd.f32 %v724, %v728
  %v752 = vtanh.pop %v751
  %v753 = vmul.f32 %v750, %v731
  %v754 = vmul.f32 %v742, %v752
  %v755 = vadd.f32 %v753, %v754
  %v756 = vadd.f32 %v726, %v730
  %v757 = vld [vmem:[%s7] sm:$0xff]
  %v758 = vmul.f32 %v755, %v757
  %v759 = vadd.f32 %v756, %v758
  %v760 = vsub.f32 0.0, %v759
  %v761 = vmul.f32 %v760, 1.442695
  %v762 = vpow.pop %v761
  %v763 = vadd.f32 %v762, 1.0
  %v764 = vrcp.pop %v763
  %v765 = vtanh.pop %v755
  %v766 = vmul.f32 %v764, %v765
  %767 = vst [vmem:[%s8] sm:$0xff] %v766
  %768 = vst [vmem:[%s9] sm:$0xff] %v755
  // Predicated region
  $region34: #{mimn_forward.1} parent=0 // pred_check
    _
  $region35: #{mimn_forward.1} parent=0 // pred_check_branch
    %770 = sbr.rel (0) target = $region37
  $region36: #{mimn_forward.1} parent=0 // pred_region
    _
  $region37: #{mimn_forward.1} parent=0 // pred_fallthru
    _
  // Predicated region
  $region38: #{mimn_forward.1} parent=0 // pred_check
    _
  $region39: #{mimn_forward.1} parent=0 // pred_check_branch
    %772 = sbr.rel (0) target = $region41
  $region40: #{mimn_forward.1} parent=0 // pred_region
    _
  $region41: #{mimn_forward.1} parent=0 // pred_fallthru
    _
  // Predicated region
  $region42: #{mimn_forward.1} parent=0 // pred_check
    _
  $region43: #{mimn_forward.1} parent=0 // pred_check_branch
    %774 = sbr.rel (0) target = $region45
  $region44: #{mimn_forward.1} parent=0 // pred_region
    _
  $region45: #{mimn_forward.1} parent=0 // pred_fallthru
    _
  // Predicated region
  $region46: #{mimn_forward.1} parent=0 // pred_check
    _
  $region47: #{mimn_forward.1} parent=0 // pred_check_branch
    %776 = sbr.rel (0) target = $region49
  $region48: #{mimn_forward.1} parent=0 // pred_region
    _
  $region49: #{mimn_forward.1} parent=0 // pred_fallthru
    _

</llo_original>
